<compile_context>
chip_gen: v7x
topology: tpu7x:2x2x1
jax: 0.10.0
libtpu: 0.0.40
codegen_flags: <defaults>
</compile_context>

<pallas_src>
import jax
import jax.numpy as jnp
from jax.experimental import pallas as pl
from jax.experimental.pallas import tpu as pltpu


_LANE = 128
_MAX_LANE_WIDTH = 4096          # 32 * 128 lanes per tile row-slab
_TILE_BYTES_CAP = 1 << 20       # 1 MiB tile; 2 arrays x 2 buffers -> <= 4 MiB live


def _copy_kernel(x_ref, o_ref):
    # Whole-tile VMEM copy (the entire forward semantics of _ConvBlock1).
    o_ref[...] = x_ref[...]


def _min_sublanes(dtype) -> int:
    # Sub-32-bit dtypes pack along sublanes: 8 rows for 4-byte, 16 for 2-byte,
    # 32 for 1-byte elements.
    itemsize = jnp.dtype(dtype).itemsize
    return max(8, 32 // itemsize)


def _pallas_identity_copy(x):
    """Materialize an exact copy of `x` through a tiled Pallas TPU kernel."""
    orig_shape = x.shape
    dtype = x.dtype
    itemsize = jnp.dtype(dtype).itemsize
    sub = _min_sublanes(dtype)
    total = x.size

    if total == 0:
        return x

    # Lane width: widest multiple of 128 (capped) that the input can fill.
    cols = _LANE
    while cols * 2 <= _MAX_LANE_WIDTH and total >= cols * 2 * sub:
        cols *= 2

    # Rows per tile: as many as fit under the tile-byte cap, rounded to the
    # dtype's natural sublane multiple, but never more than the input needs.
    rows_needed = -(-total // cols)
    rows_needed = -(-rows_needed // sub) * sub
    cap_rows = max(sub, (_TILE_BYTES_CAP // (cols * itemsize)) // sub * sub)
    rows_per_tile = min(rows_needed, cap_rows)

    # Pad (flattened) input to a whole number of tiles so every store is a
    # wide unmasked vst. Padding is only applied when the size is ragged.
    block_elems = rows_per_tile * cols
    padded_total = -(-total // block_elems) * block_elems

    flat = x.reshape(-1)
    if padded_total != total:
        flat = jnp.pad(flat, (0, padded_total - total))

    rows = padded_total // cols
    grid = (rows // rows_per_tile,)
    x2d = flat.reshape(rows, cols)

    out2d = pl.pallas_call(
        _copy_kernel,
        out_shape=jax.ShapeDtypeStruct((rows, cols), dtype),
        grid=grid,
        in_specs=[pl.BlockSpec((rows_per_tile, cols), lambda i: (i, 0))],
        out_specs=pl.BlockSpec((rows_per_tile, cols), lambda i: (i, 0)),
        compiler_params=pltpu.CompilerParams(
            dimension_semantics=("parallel",),
            # Explicit budget: 4x tile (double-buffered in+out) plus headroom;
            # safe on v5e (16 MiB default scoped), v6e, and v7x (64 MiB phys).
            vmem_limit_bytes=8 << 20,
        ),
    )(x2d)

    out_flat = out2d.reshape(-1)
    if padded_total != total:
        out_flat = out_flat[:total]
    return out_flat.reshape(orig_shape)


def conv_block1_forward(x, pointTypes=None, graphData=None, GNNDataForward=None,
                        *, materialize_copy=False):
    """Pallas equivalent of _ConvBlock1.forward: returns x unchanged.

    Default path performs ZERO HBM traffic (just returns x), which is the
    faithful and optimal implementation of the identity forward. Set
    materialize_copy=True only if a physically distinct output buffer is
    required; that path runs the tiled Pallas copy kernel.
    """
    # pointTypes / graphData / GNNDataForward intentionally unused (as in the
    # reference module's forward).
    if not materialize_copy:
        return x
    return _pallas_identity_copy(x)


if __name__ == "__main__":
    key = jax.random.PRNGKey(0)
    kx, kp = jax.random.split(key)

    # Small NCHW input consistent with a conv-block forward.
    x = jax.random.normal(kx, (2, 4, 16, 16), dtype=jnp.float32)
    # Unused-by-forward auxiliary inputs (signature parity only).
    pointTypes = jax.random.randint(kp, (2, 16 * 16), 0, 3, dtype=jnp.int32)
    graphData = None          # TODO(synk): graph structure unused by this block's forward
    GNNDataForward = None     # TODO(synk): GNN forward data unused by this block's forward

    # Fast path: true identity, no kernel, no HBM traffic.
    y_fast = conv_block1_forward(x, pointTypes, graphData, GNNDataForward)
    y_fast = jax.block_until_ready(y_fast)
    assert y_fast.shape == x.shape and y_fast.dtype == x.dtype
    assert bool(jnp.all(y_fast == x))

    # Exercise the Pallas copy kernel once (distinct-output-buffer path).
    y_copy = conv_block1_forward(x, pointTypes, graphData, GNNDataForward,
                                 materialize_copy=True)
    y_copy = jax.block_until_ready(y_copy)
    assert y_copy.shape == x.shape and y_copy.dtype == x.dtype
    assert bool(jnp.all(y_copy == x))

    print("KERNEL_OK")
</pallas_src>

<mosaic_0001>
module attributes {stable_mosaic.version = 11 : i64} {
  func.func @_copy_kernel(%arg0: i32, %arg1: memref<8x256xf32, #tpu.memory_space<vmem>>, %arg2: memref<8x256xf32, #tpu.memory_space<vmem>>) attributes {dimension_semantics = [#tpu.dimension_semantics<parallel>], iteration_bounds = array<i64: 1>, scalar_prefetch = 0 : i64, scratch_operands = 0 : i64, tpu.core_type = #tpu.core_type<tc>, window_params = [{transform_indices = @transform_0, window_bounds = array<i64: 8, 256>}, {transform_indices = @transform_1, window_bounds = array<i64: 8, 256>}]} {
    %c0 = arith.constant 0 : index
    %c0_0 = arith.constant 0 : index
    %0 = vector.load %arg1[%c0, %c0_0] : memref<8x256xf32, #tpu.memory_space<vmem>>, vector<8x256xf32>
    %c0_1 = arith.constant 0 : index
    %c0_2 = arith.constant 0 : index
    %1 = vector.load %arg2[%c0_1, %c0_2] : memref<8x256xf32, #tpu.memory_space<vmem>>, vector<8x256xf32>
    tpu.vector_store %arg2[%c0_1, %c0_2], %0 {strides = array<i32>} : memref<8x256xf32, #tpu.memory_space<vmem>>, vector<8x256xf32>,
    return
  }
  func.func @transform_0(%arg0: i32) -> (i32, i32) {
    %c0_i32 = arith.constant 0 : i32
    %c0_i32_0 = arith.constant 0 : i32
    return %arg0, %c0_i32 : i32, i32
  }
  func.func @transform_1(%arg0: i32) -> (i32, i32) {
    %c0_i32 = arith.constant 0 : i32
    %c0_i32_0 = arith.constant 0 : i32
    return %arg0, %c0_i32 : i32, i32
  }
}

</mosaic_0001>

<llo_original>
// kernel: tpu_custom_call.1
$region0: #{tpu_custom_call.1}
  #allocation0 [shape = 'u32[]', space=smem, size = 0x4, offset = 0x4, fixed_abs, tag = 'smem constant byte address 0x4 - core index']
  #allocation1 [shape = 'u32[144,128]{1,0:T(1,128)}', space=vmem, size = 0x12000, scoped, tag = 'internal scratch']
  %s0 = inlined_call_operand.hbm [shape: f32[8,256], index: 0, kind: input, shape index: {}]
  %s1 = inlined_call_operand.hbm [shape: f32[8,256], index: 1, kind: output, shape index: {}]
  %s2 = sld [smem:[#allocation0]]
  $region18: #{tpu_custom_call.1} parent=0
    _
  %s4 = ssub.s32 1, %s2
  %s5 = scalar_select 0, %s4, %s2
  $region1: #{tpu_custom_call.1} parent=0
    #allocation2 [shape = 'u8[8192]{0}', space=vmem, size = 0x2000, scoped, tag = 'input window, operand 0, single buffered']
    #allocation3 [shape = 's32[1]{0}', space=sflag, size = 0x4, scoped, tag = 'scoped memory for tpu_custom_call.1']
    #allocation4 [shape = 's32[1]{0}', space=sflag, size = 0x4, scoped, tag = 'scoped memory for tpu_custom_call.1']
    #allocation5 [shape = 'u8[8192]{0}', space=vmem, size = 0x2000, scoped, tag = 'output window, operand 0, single buffered']
    %6 = vsyncpa [#allocation3], 0
    %7 = vsyncpa [#allocation4], 0
    // Predicated region
    $region2: #{tpu_custom_call.1} parent=1 // pred_check
      _
    $region3: #{tpu_custom_call.1} parent=1 // pred_check_branch
      %9 = sbr.rel (0) target = $region5
    $region4: #{tpu_custom_call.1} parent=1 // pred_region
      %s11 = ssub.s32 256, 256
      %12 = vsyncadd [#allocation3], %s11
      %s14 = sshll.u32 [#allocation2], 4
      %s15 = int_to_ptr.vmem [resolvable:$true] %s14
      %17 = dma.hbm_to_vmem [thread:$0]  %s0, 256, %s15, [#allocation3]
    $region5: #{tpu_custom_call.1} parent=1 // pred_fallthru
      _
    // Predicated region
    $region6: #{tpu_custom_call.1} parent=1 // pred_check
      _
    $region7: #{tpu_custom_call.1} parent=1 // pred_check_branch
      %19 = sbr.rel (0) target = $region9
    $region8: #{tpu_custom_call.1} parent=1 // pred_region
      %20 = dma.done [#allocation3], 256
    $region9: #{tpu_custom_call.1} parent=1 // pred_fallthru
      _
    %v21 = vld [vmem:[#allocation2] sm:$0xff]
    %v22 = vld [vmem:[#allocation2 + $0x8] sm:$0xff]
    %23 = vst [vmem:[#allocation5] sm:$0xff] %v21
    %24 = vst [vmem:[#allocation5 + $0x8] sm:$0xff] %v22
    // Predicated region
    $region10: #{tpu_custom_call.1} parent=1 // pred_check
      _
    $region11: #{tpu_custom_call.1} parent=1 // pred_check_branch
      %26 = sbr.rel (0) target = $region13
    $region12: #{tpu_custom_call.1} parent=1 // pred_region
      %s28 = ssub.s32 256, 256
      %29 = vsyncadd [#allocation4], %s28
      %s31 = sshll.u32 [#allocation5], 4
      %s32 = int_to_ptr.vmem [resolvable:$true] %s31
      %34 = dma.vmem_to_hbm [thread:$0]  %s32, 256, %s1, [#allocation4]
    $region13: #{tpu_custom_call.1} parent=1 // pred_fallthru
      _
    // Predicated region
    $region14: #{tpu_custom_call.1} parent=1 // pred_check
      _
    $region15: #{tpu_custom_call.1} parent=1 // pred_check_branch
      %36 = sbr.rel (0) target = $region17
    $region16: #{tpu_custom_call.1} parent=1 // pred_region
      %37 = dma.done [#allocation4], 256
    $region17: #{tpu_custom_call.1} parent=1 // pred_fallthru
      _
    %38 = vsyncpa [#allocation3], 1
    %39 = vsyncpa [#allocation4], 1

</llo_original>
